<compile_context>
chip_gen: v7x
topology: tpu7x:2x2x1
jax: 0.10.0
libtpu: 0.0.40
codegen_flags: <defaults>
</compile_context>

<pallas_src>
import functools

import jax
import jax.numpy as jnp
from jax.experimental import pallas as pl
from jax.experimental.pallas import tpu as pltpu


def _round_up(x: int, m: int) -> int:
    return ((x + m - 1) // m) * m


def _pick_tile(padded_dim: int, align: int, cap: int) -> int:
    """Largest multiple of `align` that divides `padded_dim` and is <= cap.

    `padded_dim` must already be a multiple of `align`; choosing a divisor avoids
    any extra round-up-to-tile padding waste.
    """
    cap = max(align, min(cap, padded_dim))
    best = align
    for t in range(align, cap + 1, align):
        if padded_dim % t == 0:
            best = t
    return best


def mylinear_kernel(x_ref, w_ref, b_ref, o_ref, acc_ref):
    """One (tm, tn) output tile; K is the innermost ("arbitrary") grid axis."""
    k = pl.program_id(2)

    @pl.when(k == 0)
    def _init():
        acc_ref[...] = jnp.zeros_like(acc_ref)

    # MXU matmul (bf16 or f32 operands) with f32 accumulation.
    acc_ref[...] += jnp.dot(
        x_ref[...], w_ref[...], preferred_element_type=jnp.float32
    )

    @pl.when(k == pl.num_programs(2) - 1)
    def _epilogue():
        # Bias add + ReLU in f32, single final cast to the output dtype.
        acc = acc_ref[...] + b_ref[...]          # (tm,tn) + (1,tn), both f32
        o_ref[...] = jnp.maximum(acc, 0.0).astype(o_ref.dtype)


def _w_block_spec(tk: int, tn: int, deep_buffering: bool) -> pl.BlockSpec:
    idx = lambda i, j, k: (k, j)
    if deep_buffering:
        try:
            # Deeper W pipeline for skinny-batch (W-bandwidth-bound) layers.
            return pl.BlockSpec((tk, tn), idx, pipeline_mode=pl.Buffered(3))
        except (AttributeError, TypeError):
            pass  # older pallas without pipeline_mode -> fall back to default 2-deep
    return pl.BlockSpec((tk, tn), idx)


@functools.partial(jax.jit, static_argnames=("units",))
def _mylinear_fwd(x, wp, bp, *, units):
    """relu(x @ wp + bp)[:, :units] where wp/bp are pre-padded (K,N multiples of 128)."""
    B, in_units = x.shape
    Kp, Np = wp.shape
    operand_dtype = wp.dtype
    out_dtype = x.dtype

    # --- M alignment: bf16 packs [16,128] per vreg along sublanes. -----------
    m_align = 16 if operand_dtype == jnp.bfloat16 else 8
    Mp = _round_up(B, m_align)

    # --- Tile sizes: divisors of the padded dims, lane aligned, prefer 256. ---
    tm = _pick_tile(Mp, m_align, 512)
    tn = _pick_tile(Np, 256 if Np % 256 == 0 else 128, 512)
    tk = _pick_tile(Kp, 256 if Kp % 256 == 0 else 128, 1024)

    # --- Per-call work on X only: cast to operand dtype, pad batch/K. --------
    xp = x.astype(operand_dtype)
    if (Mp - B) or (Kp - in_units):
        xp = jnp.pad(xp, ((0, Mp - B), (0, Kp - in_units)))

    grid = (Mp // tm, Np // tn, Kp // tk)

    # Skinny batch (single M block) => W-bandwidth bound; deepen W buffering
    # only when there are enough W blocks to actually prefetch ahead.
    deep_w = (grid[0] == 1) and (grid[1] * grid[2] >= 3)

    # --- Explicit VMEM budget: double-buffered tiles + accumulator. ----------
    op_isz = jnp.dtype(operand_dtype).itemsize
    out_isz = jnp.dtype(out_dtype).itemsize
    w_bufs = 3 if deep_w else 2
    footprint = (
        2 * tm * tk * op_isz            # X tiles (double-buffered)
        + w_bufs * tk * tn * op_isz     # W tiles
        + 2 * tm * tn * out_isz         # output tiles
        + tm * tn * 4                   # f32 accumulator scratch
        + 2 * tn * 4                    # bias tile
    )
    vmem_limit = int(min(64 * 2**20, max(32 * 2**20, 2 * footprint)))

    cost = pl.CostEstimate(
        flops=2 * Mp * Kp * Np,
        transcendentals=0,
        bytes_accessed=(
            xp.size * op_isz + wp.size * op_isz + bp.size * 4 + Mp * Np * out_isz
        ),
    )

    out_padded = pl.pallas_call(
        mylinear_kernel,
        out_shape=jax.ShapeDtypeStruct((Mp, Np), out_dtype),
        grid_spec=pltpu.PrefetchScalarGridSpec(
            num_scalar_prefetch=0,
            grid=grid,
            in_specs=[
                # X tile: depends on (m, k)
                pl.BlockSpec((tm, tk), lambda i, j, k: (i, k)),
                # W tile: depends on (k, n); optionally triple-buffered
                _w_block_spec(tk, tn, deep_w),
                # bias tile: depends only on n -> resident across M and K steps
                pl.BlockSpec((1, tn), lambda i, j, k: (0, j)),
            ],
            out_specs=pl.BlockSpec((tm, tn), lambda i, j, k: (i, j)),
            scratch_shapes=[pltpu.VMEM((tm, tn), jnp.float32)],
        ),
        compiler_params=pltpu.CompilerParams(
            dimension_semantics=("parallel", "parallel", "arbitrary"),
            vmem_limit_bytes=vmem_limit,
        ),
        cost_estimate=cost,
    )(xp, wp, bp)

    return out_padded[:B, :units]


class MyLinearPallas:
    """relu(X @ W + b) with parameters pre-padded/pre-cast once (hoisted out of
    the per-forward-call path)."""

    def __init__(self, weight, bias, operand_dtype=jnp.bfloat16):
        in_units, units = weight.shape
        assert bias.shape == (units,)
        Kp = _round_up(in_units, 128)
        Np = _round_up(units, 128)
        self.in_units = in_units
        self.units = units
        # One-time: pad W to lane-aligned (Kp, Np) and cast to the MXU operand dtype.
        self.wp = jnp.pad(
            weight, ((0, Kp - in_units), (0, Np - units))
        ).astype(operand_dtype)
        # Bias stays f32 (used in the f32 epilogue); padded columns get bias 0
        # and are sliced off after the kernel.
        self.bp = jnp.pad(bias, (0, Np - units)).astype(jnp.float32).reshape(1, Np)

    def __call__(self, x):
        assert x.shape[-1] == self.in_units
        return _mylinear_fwd(x, self.wp, self.bp, units=self.units)


def mylinear(x, weight, bias, operand_dtype=jnp.bfloat16):
    """One-shot convenience wrapper (prefer MyLinearPallas for repeated calls)."""
    return MyLinearPallas(weight, bias, operand_dtype=operand_dtype)(x)


if __name__ == "__main__":
    key = jax.random.PRNGKey(0)
    k_x, k_w, k_b = jax.random.split(key, 3)

    batch, in_units, units = 8, 32, 64

    # Deterministic "parameters" (module init uses torch.randn -> standard normal).
    x = jax.random.normal(k_x, (batch, in_units), dtype=jnp.float32)
    weight = jax.random.normal(k_w, (in_units, units), dtype=jnp.float32)
    bias = jax.random.normal(k_b, (units,), dtype=jnp.float32)

    ref = jnp.maximum(x @ weight + bias, 0.0)

    # Default path: bf16 operands on the MXU, f32 accumulation + f32 epilogue.
    layer = MyLinearPallas(weight, bias)                 # params padded/cast once
    out = jax.block_until_ready(layer(x))
    assert out.shape == (batch, units)
    assert jnp.allclose(out, ref, atol=5e-1, rtol=5e-2), float(
        jnp.max(jnp.abs(out - ref))
    )

    # f32-operand path: tight check that the kernel logic matches the reference.
    layer_f32 = MyLinearPallas(weight, bias, operand_dtype=jnp.float32)
    out_f32 = jax.block_until_ready(layer_f32(x))
    assert jnp.allclose(out_f32, ref, atol=1e-5, rtol=1e-5)

    print("KERNEL_OK")
</pallas_src>

<mosaic_0001>
module attributes {stable_mosaic.version = 11 : i64} {
  func.func @mylinear_kernel(%arg0: i32, %arg1: i32, %arg2: i32, %arg3: memref<16x128xbf16, #tpu.memory_space<vmem>>, %arg4: memref<128x128xbf16, #tpu.memory_space<vmem>>, %arg5: memref<1x128xf32, #tpu.memory_space<vmem>>, %arg6: memref<16x128xf32, #tpu.memory_space<vmem>>, %arg7: memref<16x128xf32, #tpu.memory_space<vmem>>) attributes {dimension_semantics = [#tpu.dimension_semantics<parallel>, #tpu.dimension_semantics<parallel>, #tpu.dimension_semantics<arbitrary>], iteration_bounds = array<i64: 1, 1, 1>, scalar_prefetch = 0 : i64, scratch_operands = 1 : i64, tpu.core_type = #tpu.core_type<tc>, window_params = [{transform_indices = @transform_0, window_bounds = array<i64: 16, 128>}, {transform_indices = @transform_1, window_bounds = array<i64: 128, 128>}, {transform_indices = @transform_2, window_bounds = array<i64: 1, 128>}, {transform_indices = @transform_3, window_bounds = array<i64: 16, 128>}]} {
    %c0_i32 = arith.constant 0 : i32
    %0 = arith.cmpi eq, %arg2, %c0_i32 : i32
    %1 = arith.extui %0 : i1 to i32
    %c0_i32_0 = arith.constant 0 : i32
    %2 = arith.cmpi ne, %1, %c0_i32_0 : i32
    scf.if %2 {
      %cst_10 = arith.constant 0.000000e+00 : f32
      %12 = vector.broadcast %cst_10 : f32 to vector<16x128xf32>
      %c0_11 = arith.constant 0 : index
      %c0_12 = arith.constant 0 : index
      %13 = vector.load %arg7[%c0_11, %c0_12] : memref<16x128xf32, #tpu.memory_space<vmem>>, vector<16x128xf32>
      tpu.vector_store %arg7[%c0_11, %c0_12], %12 {strides = array<i32>} : memref<16x128xf32, #tpu.memory_space<vmem>>, vector<16x128xf32>,
    } else {
    }
    %c0 = arith.constant 0 : index
    %c0_1 = arith.constant 0 : index
    %3 = vector.load %arg7[%c0, %c0_1] : memref<16x128xf32, #tpu.memory_space<vmem>>, vector<16x128xf32>
    %c0_2 = arith.constant 0 : index
    %c0_3 = arith.constant 0 : index
    %4 = vector.load %arg3[%c0_2, %c0_3] : memref<16x128xbf16, #tpu.memory_space<vmem>>, vector<16x128xbf16>
    %c0_4 = arith.constant 0 : index
    %c0_5 = arith.constant 0 : index
    %5 = vector.load %arg4[%c0_4, %c0_5] : memref<128x128xbf16, #tpu.memory_space<vmem>>, vector<128x128xbf16>
    %cst = arith.constant dense<0.000000e+00> : vector<16x128xf32>
    %6 = tpu.matmul %4, %5, %cst {dimension_numbers = #tpu.dot_dimension_numbers<[1], [0], [0], [1], [0, 0, 1, 1], [], []>} : vector<16x128xbf16>, vector<128x128xbf16>, vector<16x128xf32> -> vector<16x128xf32>
    %7 = arith.addf %3, %6 : vector<16x128xf32>
    %c0_6 = arith.constant 0 : index
    %c0_7 = arith.constant 0 : index
    %8 = vector.load %arg7[%c0_6, %c0_7] : memref<16x128xf32, #tpu.memory_space<vmem>>, vector<16x128xf32>
    tpu.vector_store %arg7[%c0_6, %c0_7], %7 {strides = array<i32>} : memref<16x128xf32, #tpu.memory_space<vmem>>, vector<16x128xf32>,
    %c0_i32_8 = arith.constant 0 : i32
    %9 = arith.cmpi eq, %arg2, %c0_i32_8 : i32
    %10 = arith.extui %9 : i1 to i32
    %c0_i32_9 = arith.constant 0 : i32
    %11 = arith.cmpi ne, %10, %c0_i32_9 : i32
    scf.if %11 {
      %c0_10 = arith.constant 0 : index
      %c0_11 = arith.constant 0 : index
      %12 = vector.load %arg7[%c0_10, %c0_11] : memref<16x128xf32, #tpu.memory_space<vmem>>, vector<16x128xf32>
      %c0_12 = arith.constant 0 : index
      %c0_13 = arith.constant 0 : index
      %13 = vector.load %arg5[%c0_12, %c0_13] : memref<1x128xf32, #tpu.memory_space<vmem>>, vector<1x128xf32>
      %14 = vector.broadcast %13 : vector<1x128xf32> to vector<16x128xf32>
      %15 = arith.addf %12, %14 : vector<16x128xf32>
      %cst_14 = arith.constant 0.000000e+00 : f32
      %16 = vector.broadcast %cst_14 : f32 to vector<16x128xf32>
      %17 = arith.maximumf %15, %16 : vector<16x128xf32>
      %c0_15 = arith.constant 0 : index
      %c0_16 = arith.constant 0 : index
      %18 = vector.load %arg6[%c0_15, %c0_16] : memref<16x128xf32, #tpu.memory_space<vmem>>, vector<16x128xf32>
      tpu.vector_store %arg6[%c0_15, %c0_16], %17 {strides = array<i32>} : memref<16x128xf32, #tpu.memory_space<vmem>>, vector<16x128xf32>,
    } else {
    }
    return
  }
  func.func @transform_0(%arg0: i32, %arg1: i32, %arg2: i32) -> (i32, i32) {
    %c0_i32 = arith.constant 0 : i32
    return %arg0, %arg2 : i32, i32
  }
  func.func @transform_1(%arg0: i32, %arg1: i32, %arg2: i32) -> (i32, i32) {
    %c0_i32 = arith.constant 0 : i32
    return %arg2, %arg1 : i32, i32
  }
  func.func @transform_2(%arg0: i32, %arg1: i32, %arg2: i32) -> (i32, i32) {
    %c0_i32 = arith.constant 0 : i32
    %c0_i32_0 = arith.constant 0 : i32
    return %c0_i32, %arg1 : i32, i32
  }
  func.func @transform_3(%arg0: i32, %arg1: i32, %arg2: i32) -> (i32, i32) {
    %c0_i32 = arith.constant 0 : i32
    return %arg0, %arg1 : i32, i32
  }
}

</mosaic_0001>

<llo_original>
// kernel: _mylinear_fwd.1
$region0: #{_mylinear_fwd.1}
  #allocation0 [shape = 'u32[]', space=smem, size = 0x4, offset = 0x4, fixed_abs, tag = 'smem constant byte address 0x4 - core index']
  #allocation1 [shape = 'u32[144,128]{1,0:T(1,128)}', space=vmem, size = 0x12000, scoped, tag = 'internal scratch']
  #allocation2 [shape = 'f32[16,128]{1,0:T(8,128)}', space=vmem, size = 0x2000, scoped, tag = 'scratch operand']
  %s0 = inlined_call_operand.vmem [shape: bf16[16,128], index: 0, kind: input, shape index: {}]
  %s1 = inlined_call_operand.hbm [shape: bf16[128,128], index: 1, kind: input, shape index: {}]
  %s2 = inlined_call_operand.vmem [shape: f32[1,128], index: 2, kind: input, shape index: {}]
  %s3 = inlined_call_operand.vmem [shape: f32[16,128], index: 3, kind: output, shape index: {}]
  %s4 = sld [smem:[#allocation0]]
  $region34: #{_mylinear_fwd.1} parent=0
    _
  %s6 = ssub.s32 1, %s4
  %s7 = scalar_select 0, %s6, %s4
  $region1: #{_mylinear_fwd.1} parent=0
    #allocation3 [shape = 'u8[32768]{0}', space=vmem, size = 0x8000, scoped, tag = 'input window, operand 1, single buffered']
    #allocation4 [shape = 's32[1]{0}', space=sflag, size = 0x4, scoped, tag = 'scoped memory for _mylinear_fwd.1']
    %8 = vsyncpa [#allocation4], 0
    // Predicated region
    $region2: #{_mylinear_fwd.1} parent=1 // pred_check
      _
    $region3: #{_mylinear_fwd.1} parent=1 // pred_check_branch
      %10 = sbr.rel (0) target = $region5
    $region4: #{_mylinear_fwd.1} parent=1 // pred_region
      _
    $region5: #{_mylinear_fwd.1} parent=1 // pred_fallthru
      _
    // Predicated region
    $region6: #{_mylinear_fwd.1} parent=1 // pred_check
      _
    $region7: #{_mylinear_fwd.1} parent=1 // pred_check_branch
      %12 = sbr.rel (0) target = $region9
    $region8: #{_mylinear_fwd.1} parent=1 // pred_region
      %s14 = ssub.s32 1024, 1024
      %15 = vsyncadd [#allocation4], %s14
      %s16 = sshll.u32 [#allocation3], 4
      %s17 = int_to_ptr.vmem [resolvable:$true] %s16
      %22 = dma.hbm_to_vmem [thread:$0]  %s1, 1024, %s17, [#allocation4], 64, 64, 4
    $region9: #{_mylinear_fwd.1} parent=1 // pred_fallthru
      _
    // Predicated region
    $region10: #{_mylinear_fwd.1} parent=1 // pred_check
      _
    $region11: #{_mylinear_fwd.1} parent=1 // pred_check_branch
      %24 = sbr.rel (0) target = $region13
    $region12: #{_mylinear_fwd.1} parent=1 // pred_region
      _
    $region13: #{_mylinear_fwd.1} parent=1 // pred_fallthru
      _
    // Predicated region
    $region14: #{_mylinear_fwd.1} parent=1 // pred_check
      _
    $region15: #{_mylinear_fwd.1} parent=1 // pred_check_branch
      %26 = sbr.rel (0) target = $region17
    $region16: #{_mylinear_fwd.1} parent=1 // pred_region
      %27 = dma.done [#allocation4], 1024
    $region17: #{_mylinear_fwd.1} parent=1 // pred_fallthru
      _
    %p29 = scmp.eq.s32.totalorder 0, 0
    // Predicated region
    $region18: #{_mylinear_fwd.1} parent=1 // pred_check
      %p30 = pneg %p29
    $region19: #{_mylinear_fwd.1} parent=1 // pred_check_branch
      %32 = sbr.rel (%p30) target = $region21
    $region20: #{_mylinear_fwd.1} parent=1 // pred_region
      %33 = vst [vmem:[#allocation2] sm:$0xff] 0.0
      %34 = vst [vmem:[#allocation2 + $0x8] sm:$0xff] 0.0
    $region21: #{_mylinear_fwd.1} parent=1 // pred_fallthru
      _
    %v35 = vld [vmem:[#allocation2] sm:$0xff]
    %v36 = vld [vmem:[#allocation2 + $0x8] sm:$0xff]
    %v37 = vld [vmem:[%s0] sm:$0xf]
    %v38 = vld [vmem:[%s0 + $0x4] sm:$0xf]
    %v39 = vld [vmem:[#allocation3] sm:$0xf]
    %v40 = vld [vmem:[#allocation3 + $0x4] sm:$0xf]
    %v41 = vld [vmem:[#allocation3 + $0x8] sm:$0xf]
    %v42 = vld [vmem:[#allocation3 + $0xc] sm:$0xf]
    %v43 = vld [vmem:[#allocation3 + $0x10] sm:$0xf]
    %v44 = vld [vmem:[#allocation3 + $0x14] sm:$0xf]
    %v45 = vld [vmem:[#allocation3 + $0x18] sm:$0xf]
    %v46 = vld [vmem:[#allocation3 + $0x1c] sm:$0xf]
    %v47 = vld [vmem:[#allocation3 + $0x20] sm:$0xf]
    %v48 = vld [vmem:[#allocation3 + $0x24] sm:$0xf]
    %v49 = vld [vmem:[#allocation3 + $0x28] sm:$0xf]
    %v50 = vld [vmem:[#allocation3 + $0x2c] sm:$0xf]
    %v51 = vld [vmem:[#allocation3 + $0x30] sm:$0xf]
    %v52 = vld [vmem:[#allocation3 + $0x34] sm:$0xf]
    %v53 = vld [vmem:[#allocation3 + $0x38] sm:$0xf]
    %v54 = vld [vmem:[#allocation3 + $0x3c] sm:$0xf]
    %v57 = vunpack.c.l.b16 %v37
    %v58 = vunpack.c.l.b16 %v38
    %v59 = vpack.c.b16 %v58, %v57
    %v77 = vunpack.c.l.b16 %v39
    %v78 = vunpack.c.l.b16 %v40
    %v79 = vunpack.c.l.b16 %v41
    %v80 = vunpack.c.l.b16 %v42
    %v81 = vunpack.c.l.b16 %v43
    %v82 = vunpack.c.l.b16 %v44
    %v83 = vunpack.c.l.b16 %v45
    %v84 = vunpack.c.l.b16 %v46
    %v85 = vunpack.c.l.b16 %v47
    %v86 = vunpack.c.l.b16 %v48
    %v87 = vunpack.c.l.b16 %v49
    %v88 = vunpack.c.l.b16 %v50
    %v89 = vunpack.c.l.b16 %v51
    %v90 = vunpack.c.l.b16 %v52
    %v91 = vunpack.c.l.b16 %v53
    %v92 = vunpack.c.l.b16 %v54
    %v93 = vpack.c.b16 %v78, %v77
    %v94 = vpack.c.b16 %v80, %v79
    %v95 = vpack.c.b16 %v82, %v81
    %v96 = vpack.c.b16 %v84, %v83
    %v97 = vpack.c.b16 %v86, %v85
    %v98 = vpack.c.b16 %v88, %v87
    %v99 = vpack.c.b16 %v90, %v89
    %v100 = vpack.c.b16 %v92, %v91
    %109 = vmatprep.subr.bf16.mxu0 0
    %110 = vmatpush1.bf16.msra.mxu0 %v93
    %111 = vmatprep.subr.bf16.mxu0 0
    %112 = vmatpush1.bf16.msra.mxu0 %v94
    %113 = vmatprep.subr.bf16.mxu0 0
    %114 = vmatpush1.bf16.msra.mxu0 %v95
    %115 = vmatprep.subr.bf16.mxu0 0
    %116 = vmatpush1.bf16.msra.mxu0 %v96
    %117 = vmatprep.subr.bf16.mxu0 0
    %118 = vmatpush1.bf16.msra.mxu0 %v97
    %119 = vmatprep.subr.bf16.mxu0 0
    %120 = vmatpush1.bf16.msra.mxu0 %v98
    %121 = vmatprep.subr.bf16.mxu0 0
    %122 = vmatpush1.bf16.msra.mxu0 %v99
    %123 = vmatprep.subr.bf16.mxu0 0
    %124 = vmatpush1.bf16.msra.mxu0 %v100
    %125 = vmatprep.subr.bf16.mxu0 0
    %126 = vmatpush1.bf16.msra.mxu0 0
    %127 = vmatprep.subr.bf16.mxu0 0
    %128 = vmatpush1.bf16.msra.mxu0 0
    %129 = vmatprep.subr.bf16.mxu0 0
    %130 = vmatpush1.bf16.msra.mxu0 0
    %131 = vmatprep.subr.bf16.mxu0 0
    %132 = vmatpush1.bf16.msra.mxu0 0
    %133 = vmatprep.subr.bf16.mxu0 0
    %134 = vmatpush1.bf16.msra.mxu0 0
    %135 = vmatprep.subr.bf16.mxu0 0
    %136 = vmatpush1.bf16.msra.mxu0 0
    %137 = vmatprep.subr.bf16.mxu0 0
    %138 = vmatpush1.bf16.msra.mxu0 0
    %139 = vmatprep.subr.bf16.mxu0 0
    %140 = vmatpush1.bf16.msra.mxu0 0
    %141 = vmatprep.mubr.bf16.mxu0 0
    %142 = vmatmul.mubr.bf16.gmra.mrb[0].mxu0 %v59
    %v143 = vpop.f32.mrb[0].mxu0
    %v144 = vadd.f32 0.0, %v143
    %v145 = vpop.f32.mrb[0].mxu0
    %v146 = vpop.f32.mrb[0].mxu0
    %v147 = vadd.f32 0.0, %v146
    %v148 = vpop.f32.mrb[0].mxu0
    %149 = vdwg.mxu0
    %v150 = vadd.f32 %v35, %v144
    %v151 = vadd.f32 %v36, %v147
    %152 = vst [vmem:[#allocation2] sm:$0xff] %v150
    %153 = vst [vmem:[#allocation2 + $0x8] sm:$0xff] %v151
    // Predicated region
    $region22: #{_mylinear_fwd.1} parent=1 // pred_check
      %p154 = pneg %p29
    $region23: #{_mylinear_fwd.1} parent=1 // pred_check_branch
      %156 = sbr.rel (%p154) target = $region25
    $region24: #{_mylinear_fwd.1} parent=1 // pred_region
      %v157 = vld [vmem:[#allocation2] sm:$0xff]
      %v158 = vld [vmem:[#allocation2 + $0x8] sm:$0xff]
      %v159 = vld [vmem:[%s2] sm:$0x1]
      %v161 = vlaneseq
      %v162 = vshrl.u32 %v161, 7
      %v163 = vsub.s32 0, %v162
      %v164 = vrot.slane %v159, %v163
      %v166 = vadd.f32 %v157, %v164
      %v167 = vadd.f32 %v158, %v164
      %v168 = vmax.f32 %v166, 0.0
      %v169 = vmax.f32 %v167, 0.0
      %170 = vst [vmem:[%s3] sm:$0xff] %v168
      %171 = vst [vmem:[%s3 + $0x8] sm:$0xff] %v169
    $region25: #{_mylinear_fwd.1} parent=1 // pred_fallthru
      _
    // Predicated region
    $region26: #{_mylinear_fwd.1} parent=1 // pred_check
      _
    $region27: #{_mylinear_fwd.1} parent=1 // pred_check_branch
      %173 = sbr.rel (0) target = $region29
    $region28: #{_mylinear_fwd.1} parent=1 // pred_region
      _
    $region29: #{_mylinear_fwd.1} parent=1 // pred_fallthru
      _
    // Predicated region
    $region30: #{_mylinear_fwd.1} parent=1 // pred_check
      _
    $region31: #{_mylinear_fwd.1} parent=1 // pred_check_branch
      %175 = sbr.rel (0) target = $region33
    $region32: #{_mylinear_fwd.1} parent=1 // pred_region
      _
    $region33: #{_mylinear_fwd.1} parent=1 // pred_fallthru
      _
    %176 = vsyncpa [#allocation4], 1

</llo_original>
